<compile_context>
chip_gen: v7x
topology: tpu7x:2x2x1
jax: 0.10.0
libtpu: 0.0.40
codegen_flags: <defaults>
</compile_context>

<pallas_src>
import functools

import jax
import jax.numpy as jnp
from jax.experimental import pallas as pl
from jax.experimental.pallas import tpu as pltpu


def _round_up(x, m):
    return ((x + m - 1) // m) * m


def _cdiv(a, b):
    return -(-a // b)


def _pad_last(x, target):
    if x.shape[-1] == target:
        return x
    pad = [(0, 0)] * (x.ndim - 1) + [(0, target - x.shape[-1])]
    return jnp.pad(x, pad)


def _vmem_capacity_bytes():
    """Physical VMEM of the current chip; conservative fallback if unknown."""
    try:
        return int(pltpu.get_tpu_info().vmem_capacity_bytes)
    except Exception:
        return 64 * 1024 * 1024  # v7x per-core size — the smallest modern TPU


def _bf16_exp_supported():
    """EUP bf16 fast path exists on v6e / v7x, not on v5e and older."""
    try:
        kind = jax.devices()[0].device_kind.lower()
    except Exception:
        return False
    return ("v6" in kind) or ("v7" in kind) or ("7x" in kind)


def _step_vmem_bytes(bt, tq, Lk, Dp, Dvp, q_elt, k_elt, v_elt, kg_elt, out_elt):
    """Per-grid-step VMEM footprint estimate (review fix: count all f32 slabs)."""
    dbl = 2  # Pallas double-buffers every pipelined input/output tile
    io = dbl * bt * (tq * Dp * q_elt + Lk * Dp * k_elt + Lk * Dvp * v_elt
                     + tq * Lk * kg_elt + tq * Dvp * out_elt)
    # f32 temporaries Mosaic materializes: scores/attn, e1, kg(f32), z2, e2,
    # beta (~6 tq*Lk slabs) + f32 ctx accumulator (tq*Dvp).
    temps = bt * (6 * tq * Lk * 4 + tq * Dvp * 4)
    return io + temps


def sdpa_neg_kernel(q_ref, k_ref, v_ref, kg_ref, o_ref, *,
                    neg_scale, exp_dtype, safe_softmax2):
    q = q_ref[...]                              # (bt, tq, Dp)   native dtype
    k = k_ref[...]                              # (bt, Lk, Dp)
    v = v_ref[...]                              # (bt, Lk, Dvp)
    kg = kg_ref[...].astype(jnp.float32)        # (bt, tq, Lk)   f32 math

    # scores = Q @ K^T, contracting both operands' last (lane) dims — batched
    # dot_general, no explicit K transpose.
    scores = jnp.einsum("bqd,bkd->bqk", q, k,
                        preferred_element_type=jnp.float32)   # (bt, tq, Lk) f32

    # Fold the leading -1 and the optional scale into a single constant mul.
    attn = scores * neg_scale

    # softmax #1 over keys (max-trick kept: attn is unbounded).  exp runs in
    # exp_dtype (bf16 on v6e/v7x: EUP bf16 fast path; f32 on v5e).
    m1 = jnp.max(attn, axis=-1, keepdims=True)
    e1 = jnp.exp((attn - m1).astype(exp_dtype)).astype(jnp.float32)
    d1 = jnp.sum(e1, axis=-1, keepdims=True)

    # beta = softmax((-softmax1) * kg_sim).  The -1/d1 factor is folded into
    # the kg multiply so the normalized `sm1` slab is never materialized.
    neg_inv_d1 = -pl.reciprocal(d1, approx=True)               # (bt, tq, 1)
    if safe_softmax2:
        z2 = e1 * (kg * neg_inv_d1)
        z2 = z2 - jnp.max(z2, axis=-1, keepdims=True)
        e2 = jnp.exp(z2.astype(exp_dtype)).astype(jnp.float32)
    else:
        # Exponent is bounded in [-max(kg), 0]; safe for normalized
        # similarities (kg_sim in ~[0, 1]) — no row-max reduce needed.
        e2 = jnp.exp((e1 * (kg * neg_inv_d1)).astype(exp_dtype)
                     ).astype(jnp.float32)
    beta = e2 * pl.reciprocal(jnp.sum(e2, axis=-1, keepdims=True), approx=True)

    # context = beta @ V (f32 accumulation; beta fed to the MXU in V's dtype).
    ctx = jnp.einsum("bqk,bkd->bqd", beta.astype(v_ref.dtype), v,
                     preferred_element_type=jnp.float32)       # (bt, tq, Dvp)
    o_ref[...] = ctx.astype(o_ref.dtype)


def scaled_dot_product_attention_neg(Q, K, V, scale, kg_sim, *,
                                     bt=None, tq=None,
                                     exp_dtype=None, safe_softmax2=False):
    """Pallas wrapper.

    Q:[B,Lq,D]  K:[B,Lk,D]  V:[B,Lk,Dv]  kg_sim:[B,Lq,Lk]
    `scale` must be a static Python number (mirrors the PyTorch truthiness
    check).  kg_sim may be bf16 — recommended: it is the dominant HBM stream
    and the kernel upcasts it to f32 after load.
    """
    B, Lq, D = Q.shape
    _, Lk, _ = K.shape
    Dv = V.shape[-1]
    out_dtype = Q.dtype

    neg_scale = -float(scale) if scale else -1.0

    if exp_dtype is None:
        exp_dtype = jnp.bfloat16 if _bf16_exp_supported() else jnp.float32

    # ---- lane padding only (D / Dv -> multiples of 128).  Lq, Lk, B and the
    # largest tensor (kg_sim) are NOT padded/copied; partial edge blocks are
    # handled by the cdiv grid (rows & batches are independent).
    Dp = _round_up(D, 128)
    Dvp = _round_up(Dv, 128)
    Qp = _pad_last(Q, Dp)
    Kp = _pad_last(K, Dp)
    Vp = _pad_last(V, Dvp)

    q_elt = jnp.dtype(Qp.dtype).itemsize
    k_elt = jnp.dtype(Kp.dtype).itemsize
    v_elt = jnp.dtype(Vp.dtype).itemsize
    kg_elt = jnp.dtype(kg_sim.dtype).itemsize
    out_elt = jnp.dtype(out_dtype).itemsize

    # ---- generation-aware VMEM budget / explicit scoped limit -------------
    cap = _vmem_capacity_bytes()           # 128 MiB v5e/v6e, 64 MiB v7x
    budget = cap // 2                      # tiles sized against ~50% physical
    vmem_limit = int(cap * 0.7)            # explicit scoped VMEM limit

    def footprint(bt_, tq_):
        return _step_vmem_bytes(bt_, tq_, Lk, Dp, Dvp,
                                q_elt, k_elt, v_elt, kg_elt, out_elt)

    # ---- tile selection -----------------------------------------------------
    if tq is None:
        if Lq <= 8:
            tq = Lq                         # full extent
        else:
            tq = min(_round_up(Lq, 8), 512)
            while tq > 8 and footprint(1, tq) > budget:
                tq = max(8, _round_up(tq // 2, 8))
    if bt is None:
        per_b = max(footprint(1, tq), 1)
        bt = max(1, min(B, budget // per_b))

    n_b, n_q = _cdiv(B, bt), _cdiv(Lq, tq)
    # Guarantee >=2 grid steps (v7x has 2 TensorCores; also restores
    # DMA/compute overlap on all generations).
    if n_b * n_q < 2:
        if B >= 2:
            bt = _cdiv(B, 2)
        elif Lq >= 16:
            tq = _round_up(_cdiv(Lq, 2), 8)
        n_b, n_q = _cdiv(B, bt), _cdiv(Lq, tq)

    kernel = functools.partial(sdpa_neg_kernel, neg_scale=neg_scale,
                               exp_dtype=exp_dtype,
                               safe_softmax2=safe_softmax2)

    in_bytes = (Qp.size * q_elt + Kp.size * k_elt + Vp.size * v_elt
                + kg_sim.size * kg_elt)
    out_bytes = B * Lq * Dvp * out_elt

    ctx = pl.pallas_call(
        kernel,
        out_shape=jax.ShapeDtypeStruct((B, Lq, Dvp), out_dtype),
        grid_spec=pltpu.PrefetchScalarGridSpec(
            num_scalar_prefetch=0,
            grid=(n_b, n_q),
            in_specs=[
                pl.BlockSpec((bt, tq, Dp), lambda b, q: (b, q, 0)),    # Q
                pl.BlockSpec((bt, Lk, Dp), lambda b, q: (b, 0, 0)),    # K
                pl.BlockSpec((bt, Lk, Dvp), lambda b, q: (b, 0, 0)),   # V
                pl.BlockSpec((bt, tq, Lk), lambda b, q: (b, q, 0)),    # kg_sim
            ],
            out_specs=pl.BlockSpec((bt, tq, Dvp), lambda b, q: (b, q, 0)),
        ),
        compiler_params=pltpu.CompilerParams(
            dimension_semantics=("parallel", "parallel"),
            vmem_limit_bytes=vmem_limit),
        cost_estimate=pl.CostEstimate(
            flops=2 * B * Lq * Lk * (Dp + Dvp),
            transcendentals=2 * B * Lq * Lk,
            bytes_accessed=in_bytes + out_bytes),
    )(Qp, Kp, Vp, kg_sim)

    if Dvp != Dv:
        ctx = ctx[..., :Dv]
    return ctx


def reference_jax(Q, K, V, scale, kg_sim):
    attn = -1.0 * jnp.einsum("bqd,bkd->bqk", Q, K)
    if scale:
        attn = attn * scale
    attn = -1.0 * jax.nn.softmax(attn, axis=-1)
    beta = jax.nn.softmax(attn * kg_sim, axis=-1)
    return jnp.einsum("bqk,bkd->bqd", beta, V)


if __name__ == "__main__":
    key = jax.random.PRNGKey(0)
    B, Lq, Lk, D, Dv = 2, 8, 8, 32, 32

    kq, kk, kv, kgk = jax.random.split(key, 4)
    Q = jax.random.normal(kq, (B, Lq, D), dtype=jnp.float32)
    K = jax.random.normal(kk, (B, Lk, D), dtype=jnp.float32)
    V = jax.random.normal(kv, (B, Lk, Dv), dtype=jnp.float32)
    kg_sim = jax.random.uniform(kgk, (B, Lq, Lk), dtype=jnp.float32)
    scale = 1.0 / (D ** 0.5)

    out = jax.block_until_ready(
        scaled_dot_product_attention_neg(Q, K, V, scale, kg_sim))
    ref = reference_jax(Q, K, V, scale, kg_sim)

    assert out.shape == (B, Lq, Dv)
    # Tolerance covers pl.reciprocal(approx=True) in both softmax denominators
    # and the bf16-exp fast path used on v6e/v7x.
    assert jnp.allclose(out, ref, atol=2e-2, rtol=2e-2), "mismatch vs reference"

    print("KERNEL_OK")
</pallas_src>

<mosaic_0001>
module attributes {stable_mosaic.version = 11 : i64} {
  func.func @sdpa_neg_kernel(%arg0: i32, %arg1: i32, %arg2: memref<1x8x128xf32, #tpu.memory_space<vmem>>, %arg3: memref<1x8x128xf32, #tpu.memory_space<vmem>>, %arg4: memref<1x8x128xf32, #tpu.memory_space<vmem>>, %arg5: memref<1x8x8xf32, #tpu.memory_space<vmem>>, %arg6: memref<1x8x128xf32, #tpu.memory_space<vmem>>) attributes {dimension_semantics = [#tpu.dimension_semantics<parallel>, #tpu.dimension_semantics<parallel>], iteration_bounds = array<i64: 2, 1>, scalar_prefetch = 0 : i64, scratch_operands = 0 : i64, tpu.core_type = #tpu.core_type<tc>, window_params = [{transform_indices = @transform_0, window_bounds = array<i64: 1, 8, 128>}, {transform_indices = @transform_1, window_bounds = array<i64: 1, 8, 128>}, {transform_indices = @transform_2, window_bounds = array<i64: 1, 8, 128>}, {transform_indices = @transform_3, window_bounds = array<i64: 1, 8, 8>}, {transform_indices = @transform_4, window_bounds = array<i64: 1, 8, 128>}]} {
    %c0 = arith.constant 0 : index
    %c0_0 = arith.constant 0 : index
    %c0_1 = arith.constant 0 : index
    %0 = vector.load %arg2[%c0, %c0_0, %c0_1] : memref<1x8x128xf32, #tpu.memory_space<vmem>>, vector<1x8x128xf32>
    %c0_2 = arith.constant 0 : index
    %c0_3 = arith.constant 0 : index
    %c0_4 = arith.constant 0 : index
    %1 = vector.load %arg3[%c0_2, %c0_3, %c0_4] : memref<1x8x128xf32, #tpu.memory_space<vmem>>, vector<1x8x128xf32>
    %c0_5 = arith.constant 0 : index
    %c0_6 = arith.constant 0 : index
    %c0_7 = arith.constant 0 : index
    %2 = vector.load %arg4[%c0_5, %c0_6, %c0_7] : memref<1x8x128xf32, #tpu.memory_space<vmem>>, vector<1x8x128xf32>
    %c0_8 = arith.constant 0 : index
    %c0_9 = arith.constant 0 : index
    %c0_10 = arith.constant 0 : index
    %3 = vector.load %arg5[%c0_8, %c0_9, %c0_10] : memref<1x8x8xf32, #tpu.memory_space<vmem>>, vector<1x8x8xf32>
    "tpu.trace_start"() <{level = 10 : i32, message = "bqd,bkd->bqk"}> : () -> ()
    %cst = arith.constant dense<0.000000e+00> : vector<1x8x8xf32>
    %4 = tpu.matmul %0, %1, %cst {dimension_numbers = #tpu.dot_dimension_numbers<[2], [2], [1], [1], [0, 0, 0, 1, 1, 1], [0], [0]>} : vector<1x8x128xf32>, vector<1x8x128xf32>, vector<1x8x8xf32> -> vector<1x8x8xf32>
    "tpu.trace_stop"() : () -> ()
    %cst_11 = arith.constant -0.176776692 : f32
    %5 = vector.broadcast %cst_11 : f32 to vector<1x8x8xf32>
    %6 = arith.mulf %4, %5 : vector<1x8x8xf32>
    %cst_12 = arith.constant dense<0xFF800000> : vector<1x8xf32>
    %7 = vector.multi_reduction <maximumf>, %6, %cst_12 [2] : vector<1x8x8xf32> to vector<1x8xf32>
    %8 = vector.shape_cast %7 : vector<1x8xf32> to vector<1x8x1xf32>
    %9 = vector.broadcast %8 : vector<1x8x1xf32> to vector<1x8x8xf32>
    %10 = arith.subf %6, %9 : vector<1x8x8xf32>
    %11 = math.exp %10 : vector<1x8x8xf32>
    %cst_13 = arith.constant dense<0.000000e+00> : vector<1x8xf32>
    %12 = vector.multi_reduction <add>, %11, %cst_13 [2] : vector<1x8x8xf32> to vector<1x8xf32>
    %13 = vector.shape_cast %12 : vector<1x8xf32> to vector<1x8x1xf32>
    %14 = tpu.reciprocal %13 {approx = true} : vector<1x8x1xf32> -> vector<1x8x1xf32>
    %cst_14 = arith.constant 0.000000e+00 : f32
    %15 = vector.broadcast %cst_14 : f32 to vector<1x8x1xf32>
    %16 = arith.subf %15, %14 : vector<1x8x1xf32>
    %17 = vector.broadcast %16 : vector<1x8x1xf32> to vector<1x8x8xf32>
    %18 = arith.mulf %3, %17 : vector<1x8x8xf32>
    %19 = arith.mulf %11, %18 : vector<1x8x8xf32>
    %20 = math.exp %19 : vector<1x8x8xf32>
    %cst_15 = arith.constant dense<0.000000e+00> : vector<1x8xf32>
    %21 = vector.multi_reduction <add>, %20, %cst_15 [2] : vector<1x8x8xf32> to vector<1x8xf32>
    %22 = vector.shape_cast %21 : vector<1x8xf32> to vector<1x8x1xf32>
    %23 = tpu.reciprocal %22 {approx = true} : vector<1x8x1xf32> -> vector<1x8x1xf32>
    %24 = vector.broadcast %23 : vector<1x8x1xf32> to vector<1x8x8xf32>
    %25 = arith.mulf %20, %24 : vector<1x8x8xf32>
    "tpu.trace_start"() <{level = 10 : i32, message = "bqk,bkd->bqd"}> : () -> ()
    %cst_16 = arith.constant dense<0.000000e+00> : vector<1x8x128xf32>
    %26 = tpu.matmul %25, %2, %cst_16 {dimension_numbers = #tpu.dot_dimension_numbers<[2], [1], [1], [2], [0, 0, 0, 1, 1, 2], [0], [0]>} : vector<1x8x8xf32>, vector<1x8x128xf32>, vector<1x8x128xf32> -> vector<1x8x128xf32>
    "tpu.trace_stop"() : () -> ()
    %c0_17 = arith.constant 0 : index
    %c0_18 = arith.constant 0 : index
    %c0_19 = arith.constant 0 : index
    %27 = vector.load %arg6[%c0_17, %c0_18, %c0_19] : memref<1x8x128xf32, #tpu.memory_space<vmem>>, vector<1x8x128xf32>
    tpu.vector_store %arg6[%c0_17, %c0_18, %c0_19], %26 {strides = array<i32>} : memref<1x8x128xf32, #tpu.memory_space<vmem>>, vector<1x8x128xf32>,
    return
  }
  func.func @transform_0(%arg0: i32, %arg1: i32) -> (i32, i32, i32) {
    %c0_i32 = arith.constant 0 : i32
    %c0_i32_0 = arith.constant 0 : i32
    return %arg0, %arg1, %c0_i32 : i32, i32, i32
  }
  func.func @transform_1(%arg0: i32, %arg1: i32) -> (i32, i32, i32) {
    %c0_i32 = arith.constant 0 : i32
    %c0_i32_0 = arith.constant 0 : i32
    %c0_i32_1 = arith.constant 0 : i32
    return %arg0, %c0_i32, %c0_i32_0 : i32, i32, i32
  }
  func.func @transform_2(%arg0: i32, %arg1: i32) -> (i32, i32, i32) {
    %c0_i32 = arith.constant 0 : i32
    %c0_i32_0 = arith.constant 0 : i32
    %c0_i32_1 = arith.constant 0 : i32
    return %arg0, %c0_i32, %c0_i32_0 : i32, i32, i32
  }
  func.func @transform_3(%arg0: i32, %arg1: i32) -> (i32, i32, i32) {
    %c0_i32 = arith.constant 0 : i32
    %c0_i32_0 = arith.constant 0 : i32
    return %arg0, %arg1, %c0_i32 : i32, i32, i32
  }
  func.func @transform_4(%arg0: i32, %arg1: i32) -> (i32, i32, i32) {
    %c0_i32 = arith.constant 0 : i32
    %c0_i32_0 = arith.constant 0 : i32
    return %arg0, %arg1, %c0_i32 : i32, i32, i32
  }
}

</mosaic_0001>

<llo_original>
// kernel: tpu_custom_call.1
$region0: #{tpu_custom_call.1}
  #allocation0 [shape = 'u32[]', space=smem, size = 0x4, offset = 0x4, fixed_abs, tag = 'smem constant byte address 0x4 - core index']
  #allocation1 [shape = 'u32[144,128]{1,0:T(1,128)}', space=vmem, size = 0x12000, scoped, tag = 'internal scratch']
  %s0 = inlined_call_operand.hbm [shape: f32[2,8,128], index: 0, kind: input, shape index: {}]
  %s1 = inlined_call_operand.hbm [shape: f32[2,8,128], index: 1, kind: input, shape index: {}]
  %s2 = inlined_call_operand.hbm [shape: f32[2,8,128], index: 2, kind: input, shape index: {}]
  %s3 = inlined_call_operand.hbm [shape: f32[2,8,8], index: 3, kind: input, shape index: {}]
  %s4 = inlined_call_operand.hbm [shape: f32[2,8,128], index: 4, kind: output, shape index: {}]
  %s5 = sld [smem:[#allocation0]]
  $region65: #{tpu_custom_call.1} parent=0
    _
  %s7 = ssub.s32 1, %s5
  %s8 = scalar_select 0, %s7, %s5
  $region1: #{tpu_custom_call.1} parent=0
    #allocation2 [shape = 'u8[8192]{0}', space=vmem, size = 0x2000, scoped, tag = 'input window, operand 0']
    #allocation3 [shape = 's32[2]{0}', space=sflag, size = 0x8, scoped, tag = 'scoped memory for tpu_custom_call.1']
    #allocation4 [shape = 's32[2]{0}', space=sflag, size = 0x8, scoped, tag = 'scoped memory for tpu_custom_call.1']
    #allocation5 [shape = 'u8[8192]{0}', space=vmem, size = 0x2000, scoped, tag = 'input window, operand 1']
    #allocation6 [shape = 's32[2]{0}', space=sflag, size = 0x8, scoped, tag = 'scoped memory for tpu_custom_call.1']
    #allocation7 [shape = 'u8[8192]{0}', space=vmem, size = 0x2000, scoped, tag = 'input window, operand 2']
    #allocation8 [shape = 'u8[8192]{0}', space=vmem, size = 0x2000, scoped, tag = 'input window, operand 3']
    #allocation9 [shape = 's32[2]{0}', space=sflag, size = 0x8, scoped, tag = 'scoped memory for tpu_custom_call.1']
    #allocation10 [shape = 'u8[8192]{0}', space=vmem, size = 0x2000, scoped, tag = 'output window, operand 0']
    %9 = vsyncpa [#allocation3], 0
    %s10 = scalar_lea.sflag [#allocation3], 1
    %11 = vsyncpa %s10, 0
    %12 = vsyncpa [#allocation6], 0
    %s13 = scalar_lea.sflag [#allocation6], 1
    %14 = vsyncpa %s13, 0
    %15 = vsyncpa [#allocation9], 0
    %s16 = scalar_lea.sflag [#allocation9], 1
    %17 = vsyncpa %s16, 0
    %18 = vsyncpa [#allocation4], 0
    %s19 = scalar_lea.sflag [#allocation4], 1
    %20 = vsyncpa %s19, 0
    loop: start=0, step=1, limit=4
    $region2: #{tpu_custom_call.1} parent=1 // loop_pre_header
      _
    $region3: #{tpu_custom_call.1} parent=1 // loop_header
      %s22 = sphi 0, %s26
      %p23 = scmp.ge.s32.totalorder %s22, 4
      %s29 = sphi 0, %s41
      %s30 = sphi 0, %s37
      %s31 = sphi 0, %s29
      %s32 = sphi 0, %s30
      %s33 = sphi 0, %s31
      %s34 = sphi 0, %s32
      %s46 = sphi 0, %s48
      %s49 = sphi 0, %s46
      %s50 = sphi 0, %s49
      %s66 = sphi 0, %s50
      %s72 = sphi 0, %s74
      %s75 = sphi 0, %s72
      %s76 = sphi 0, %s75
      %s92 = sphi 0, %s76
      %s98 = sphi 0, %s100
      %s101 = sphi 0, %s98
      %s102 = sphi 0, %s101
      %s118 = sphi 0, %s102
      %s126 = sphi 0, %s128
      %s129 = sphi 0, %s126
      %s130 = sphi 0, %s129
      %s146 = sphi 0, %s130
      %s154 = sphi 0, %s156
      %s157 = sphi 0, %s154
      %s158 = sphi 0, %s157
      %s174 = sphi 0, %s158
    $region4: #{tpu_custom_call.1} parent=1 // loop_header_branch
      %25 = sbr.rel (%p23) target = $region8
    $region5: #{tpu_custom_call.1} parent=1 // loop_body
      %s27 = ssub.s32 %s22, 1
      %s28 = ssub.s32 %s22, 2
      %s35 = sadd.s32 1, %s30
      %p36 = scmp.ge.s32.totalorder %s35, 1
      %s37 = scalar_select %p36, 0, %s35
      %s38 = sadd.s32 1, %s29
      %s39 = scalar_select %p36, %s38, %s29
      %p40 = scmp.ge.s32.totalorder %s39, 2
      %s41 = scalar_select %p40, 0, %s39
      %s42 = ssub.s32 %s29, %s41
      %s43 = ssub.s32 %s30, %s37
      %s44 = sor.u32 %s42, %s43
      %p45 = scmp.eq.s32.totalorder %s44, 0
      %s47 = sadd.s32 %s46, 1
      %s48 = scalar_select %p45, %s46, %s47
      %p51 = pneg %p45
      %p52 = scmp.eq.s32.totalorder %s22, 1
      %p53 = por %p51, %p52
      %p54 = scmp.ne.s32.totalorder %s46, %s49
      %p55 = scmp.eq.s32.totalorder %s22, 0
      %p56 = por %p54, %p55
      %p57 = scmp.ne.s32.totalorder %s46, %s49
      %p58 = scmp.eq.s32.totalorder %s27, 1
      %p59 = por %p57, %p58
      %p60 = scmp.ne.s32.totalorder %s49, %s50
      %p61 = scmp.eq.s32.totalorder %s27, 0
      %p62 = por %p60, %p61
      %p63 = scmp.ne.s32.totalorder %s49, %s50
      %p64 = scmp.eq.s32.totalorder %s28, 1
      %p65 = por %p63, %p64
      %p67 = scmp.ne.s32.totalorder %s50, %s66
      %p68 = scmp.eq.s32.totalorder %s28, 0
      %p69 = por %p67, %p68
      %s70 = ssub.s32 %s29, %s41
      %p71 = scmp.eq.s32.totalorder %s70, 0
      %s73 = sadd.s32 %s72, 1
      %s74 = scalar_select %p71, %s72, %s73
      %p77 = pneg %p71
      %p78 = scmp.eq.s32.totalorder %s22, 1
      %p79 = por %p77, %p78
      %p80 = scmp.ne.s32.totalorder %s72, %s75
      %p81 = scmp.eq.s32.totalorder %s22, 0
      %p82 = por %p80, %p81
      %p83 = scmp.ne.s32.totalorder %s72, %s75
      %p84 = scmp.eq.s32.totalorder %s27, 1
      %p85 = por %p83, %p84
      %p86 = scmp.ne.s32.totalorder %s75, %s76
      %p87 = scmp.eq.s32.totalorder %s27, 0
      %p88 = por %p86, %p87
      %p89 = scmp.ne.s32.totalorder %s75, %s76
      %p90 = scmp.eq.s32.totalorder %s28, 1
      %p91 = por %p89, %p90
      %p93 = scmp.ne.s32.totalorder %s76, %s92
      %p94 = scmp.eq.s32.totalorder %s28, 0
      %p95 = por %p93, %p94
      %s96 = ssub.s32 %s29, %s41
      %p97 = scmp.eq.s32.totalorder %s96, 0
      %s99 = sadd.s32 %s98, 1
      %s100 = scalar_select %p97, %s98, %s99
      %p103 = pneg %p97
      %p104 = scmp.eq.s32.totalorder %s22, 1
      %p105 = por %p103, %p104
      %p106 = scmp.ne.s32.totalorder %s98, %s101
      %p107 = scmp.eq.s32.totalorder %s22, 0
      %p108 = por %p106, %p107
      %p109 = scmp.ne.s32.totalorder %s98, %s101
      %p110 = scmp.eq.s32.totalorder %s27, 1
      %p111 = por %p109, %p110
      %p112 = scmp.ne.s32.totalorder %s101, %s102
      %p113 = scmp.eq.s32.totalorder %s27, 0
      %p114 = por %p112, %p113
      %p115 = scmp.ne.s32.totalorder %s101, %s102
      %p116 = scmp.eq.s32.totalorder %s28, 1
      %p117 = por %p115, %p116
      %p119 = scmp.ne.s32.totalorder %s102, %s118
      %p120 = scmp.eq.s32.totalorder %s28, 0
      %p121 = por %p119, %p120
      %s122 = ssub.s32 %s29, %s41
      %s123 = ssub.s32 %s30, %s37
      %s124 = sor.u32 %s122, %s123
      %p125 = scmp.eq.s32.totalorder %s124, 0
      %s127 = sadd.s32 %s126, 1
      %s128 = scalar_select %p125, %s126, %s127
      %p131 = pneg %p125
      %p132 = scmp.eq.s32.totalorder %s22, 1
      %p133 = por %p131, %p132
      %p134 = scmp.ne.s32.totalorder %s126, %s129
      %p135 = scmp.eq.s32.totalorder %s22, 0
      %p136 = por %p134, %p135
      %p137 = scmp.ne.s32.totalorder %s126, %s129
      %p138 = scmp.eq.s32.totalorder %s27, 1
      %p139 = por %p137, %p138
      %p140 = scmp.ne.s32.totalorder %s129, %s130
      %p141 = scmp.eq.s32.totalorder %s27, 0
      %p142 = por %p140, %p141
      %p143 = scmp.ne.s32.totalorder %s129, %s130
      %p144 = scmp.eq.s32.totalorder %s28, 1
      %p145 = por %p143, %p144
      %p147 = scmp.ne.s32.totalorder %s130, %s146
      %p148 = scmp.eq.s32.totalorder %s28, 0
      %p149 = por %p147, %p148
      %s150 = ssub.s32 %s29, %s41
      %s151 = ssub.s32 %s30, %s37
      %s152 = sor.u32 %s150, %s151
      %p153 = scmp.eq.s32.totalorder %s152, 0
      %s155 = sadd.s32 %s154, 1
      %s156 = scalar_select %p153, %s154, %s155
      %p159 = pneg %p153
      %p160 = scmp.eq.s32.totalorder %s22, 1
      %p161 = por %p159, %p160
      %p162 = scmp.ne.s32.totalorder %s154, %s157
      %p163 = scmp.eq.s32.totalorder %s22, 0
      %p164 = por %p162, %p163
      %p165 = scmp.ne.s32.totalorder %s154, %s157
      %p166 = scmp.eq.s32.totalorder %s27, 1
      %p167 = por %p165, %p166
      %p168 = scmp.ne.s32.totalorder %s157, %s158
      %p169 = scmp.eq.s32.totalorder %s27, 0
      %p170 = por %p168, %p169
      %p171 = scmp.ne.s32.totalorder %s157, %s158
      %p172 = scmp.eq.s32.totalorder %s28, 1
      %p173 = por %p171, %p172
      %p175 = scmp.ne.s32.totalorder %s158, %s174
      %p176 = scmp.eq.s32.totalorder %s28, 0
      %p177 = por %p175, %p176
      %p178 = scmp.le.s32.totalorder 1, %s22
      %p179 = scmp.lt.s32.totalorder %s22, 3
      %p180 = pnand %p178, %p179
      %p181 = pneg %p180
      // Predicated region
      $region9: #{tpu_custom_call.1} parent=5 // pred_check
        _
      $region10: #{tpu_custom_call.1} parent=5 // pred_check_branch
        %183 = sbr.rel (%p180) target = $region12
      $region11: #{tpu_custom_call.1} parent=5 // pred_region
        %s184 = ssub.s32 %s22, 1
      $region12: #{tpu_custom_call.1} parent=5 // pred_fallthru
        _
      %p185 = scmp.lt.s32.totalorder %s22, 2
      // Predicated region
      $region13: #{tpu_custom_call.1} parent=5 // pred_check
        %p186 = pneg %p185
      $region14: #{tpu_custom_call.1} parent=5 // pred_check_branch
        %188 = sbr.rel (%p186) target = $region16
      $region15: #{tpu_custom_call.1} parent=5 // pred_region
        // Predicated region
        $region17: #{tpu_custom_call.1} parent=15 // pred_check
          %p189 = pneg %p56
        $region18: #{tpu_custom_call.1} parent=15 // pred_check_branch
          %191 = sbr.rel (%p189) target = $region20
        $region19: #{tpu_custom_call.1} parent=15 // pred_region
          %s192 = sand.u32 %s46, 1
          %s193 = scalar_lea.sflag [#allocation3], %s192
          %s194 = sand.u32 %s46, 1
          %s195 = smul.addr %s194, 8
          %s196 = scalar_lea.vmem [#allocation2], %s195
          %s198 = ssub.s32 128, 128
          %199 = vsyncadd %s193, %s198
          %s200 = sadd.s32 %s30, %s29
          %s201 = smul.addr %s200, 128
          %s202 = scalar_lea.hbm %s0, %s201
          %s204 = sshll.u32 %s196, 4
          %s205 = int_to_ptr.vmem [resolvable:$true] %s204
          %207 = dma.hbm_to_vmem [thread:$0]  %s202, 128, %s205, %s193
        $region20: #{tpu_custom_call.1} parent=15 // pred_fallthru
          _
        // Predicated region
        $region21: #{tpu_custom_call.1} parent=15 // pred_check
          %p208 = pneg %p82
        $region22: #{tpu_custom_call.1} parent=15 // pred_check_branch
          %210 = sbr.rel (%p208) target = $region24
        $region23: #{tpu_custom_call.1} parent=15 // pred_region
          %s211 = sand.u32 %s22, 1
          %s212 = scalar_lea.sflag [#allocation6], %s211
          %s213 = sand.u32 %s72, 1
          %s214 = smul.addr %s213, 8
          %s215 = scalar_lea.vmem [#allocation5], %s214
          %s217 = ssub.s32 128, 128
          %218 = vsyncadd %s212, %s217
          %s219 = smul.addr %s29, 128
          %s220 = scalar_lea.hbm %s1, %s219
          %s222 = sshll.u32 %s215, 4
          %s223 = int_to_ptr.vmem [resolvable:$true] %s222
          %225 = dma.hbm_to_vmem [thread:$0]  %s220, 128, %s223, %s212
        $region24: #{tpu_custom_call.1} parent=15 // pred_fallthru
          _
        // Predicated region
        $region25: #{tpu_custom_call.1} parent=15 // pred_check
          %p226 = pneg %p108
        $region26: #{tpu_custom_call.1} parent=15 // pred_check_branch
          %228 = sbr.rel (%p226) target = $region28
        $region27: #{tpu_custom_call.1} parent=15 // pred_region
          %s229 = sand.u32 %s22, 1
          %s230 = scalar_lea.sflag [#allocation6], %s229
          %s231 = sand.u32 %s98, 1
          %s232 = smul.addr %s231, 8
          %s233 = scalar_lea.vmem [#allocation7], %s232
          %s235 = ssub.s32 128, 128
          %236 = vsyncadd %s230, %s235
          %s237 = smul.addr %s29, 128
          %s238 = scalar_lea.hbm %s2, %s237
          %s240 = sshll.u32 %s233, 4
          %s241 = int_to_ptr.vmem [resolvable:$true] %s240
          %243 = dma.hbm_to_vmem [thread:$0]  %s238, 128, %s241, %s230
        $region28: #{tpu_custom_call.1} parent=15 // pred_fallthru
          _
        // Predicated region
        $region29: #{tpu_custom_call.1} parent=15 // pred_check
          %p244 = pneg %p136
        $region30: #{tpu_custom_call.1} parent=15 // pred_check_branch
          %246 = sbr.rel (%p244) target = $region32
        $region31: #{tpu_custom_call.1} parent=15 // pred_region
          %s247 = sand.u32 %s126, 1
          %s248 = scalar_lea.sflag [#allocation9], %s247
          %s249 = sand.u32 %s126, 1
          %s250 = smul.addr %s249, 8
          %s251 = scalar_lea.vmem [#allocation8], %s250
          %s253 = ssub.s32 128, 128
          %254 = vsyncadd %s248, %s253
          %s255 = sadd.s32 %s30, %s29
          %s256 = smul.addr %s255, 128
          %s257 = scalar_lea.hbm %s3, %s256
          %s259 = sshll.u32 %s251, 4
          %s260 = int_to_ptr.vmem [resolvable:$true] %s259
          %262 = dma.hbm_to_vmem [thread:$0]  %s257, 128, %s260, %s248
        $region32: #{tpu_custom_call.1} parent=15 // pred_fallthru
          _
      $region16: #{tpu_custom_call.1} parent=5 // pred_fallthru
        _
      %p263 = scmp.le.s32.totalorder 1, %s22
      %p264 = scmp.lt.s32.totalorder %s22, 3
      %p265 = pnand %p263, %p264
      %p266 = pneg %p265
      // Predicated region
      $region33: #{tpu_custom_call.1} parent=5 // pred_check
        _
      $region34: #{tpu_custom_call.1} parent=5 // pred_check_branch
        %268 = sbr.rel (%p265) target = $region36
      $region35: #{tpu_custom_call.1} parent=5 // pred_region
        %s269 = ssub.s32 %s22, 1
        %s270 = sand.u32 %s49, 1
        %s271 = scalar_lea.sflag [#allocation3], %s270
        %s272 = sand.u32 %s49, 1
        %s273 = smul.addr %s272, 8
        %s274 = scalar_lea.vmem [#allocation2], %s273
        // Predicated region
        $region37: #{tpu_custom_call.1} parent=35 // pred_check
          %p275 = pneg %p62
        $region38: #{tpu_custom_call.1} parent=35 // pred_check_branch
          %277 = sbr.rel (%p275) target = $region40
        $region39: #{tpu_custom_call.1} parent=35 // pred_region
          %278 = dma.done %s271, 128
        $region40: #{tpu_custom_call.1} parent=35 // pred_fallthru
          _
        %s279 = sand.u32 %s27, 1
        %s280 = scalar_lea.sflag [#allocation6], %s279
        %s281 = sand.u32 %s75, 1
        %s282 = smul.addr %s281, 8
        %s283 = scalar_lea.vmem [#allocation5], %s282
        // Predicated region
        $region41: #{tpu_custom_call.1} parent=35 // pred_check
          %p284 = pneg %p88
        $region42: #{tpu_custom_call.1} parent=35 // pred_check_branch
          %286 = sbr.rel (%p284) target = $region44
        $region43: #{tpu_custom_call.1} parent=35 // pred_region
          %287 = dma.done %s280, 128
        $region44: #{tpu_custom_call.1} parent=35 // pred_fallthru
          _
        %s288 = sand.u32 %s27, 1
        %s289 = scalar_lea.sflag [#allocation6], %s288
        %s290 = sand.u32 %s101, 1
        %s291 = smul.addr %s290, 8
        %s292 = scalar_lea.vmem [#allocation7], %s291
        // Predicated region
        $region45: #{tpu_custom_call.1} parent=35 // pred_check
          %p293 = pneg %p114
        $region46: #{tpu_custom_call.1} parent=35 // pred_check_branch
          %295 = sbr.rel (%p293) target = $region48
        $region47: #{tpu_custom_call.1} parent=35 // pred_region
          %296 = dma.done %s289, 128
        $region48: #{tpu_custom_call.1} parent=35 // pred_fallthru
          _
        %s297 = sand.u32 %s129, 1
        %s298 = scalar_lea.sflag [#allocation9], %s297
        %s299 = sand.u32 %s129, 1
        %s300 = smul.addr %s299, 8
        %s301 = scalar_lea.vmem [#allocation8], %s300
        // Predicated region
        $region49: #{tpu_custom_call.1} parent=35 // pred_check
          %p302 = pneg %p142
        $region50: #{tpu_custom_call.1} parent=35 // pred_check_branch
          %304 = sbr.rel (%p302) target = $region52
        $region51: #{tpu_custom_call.1} parent=35 // pred_region
          %305 = dma.done %s298, 128
        $region52: #{tpu_custom_call.1} parent=35 // pred_fallthru
          _
        %s306 = sand.u32 %s49, 1
        %s307 = scalar_lea.sflag [#allocation3], %s306
        %s308 = sand.u32 %s49, 1
        %s309 = smul.addr %s308, 8
        %s310 = scalar_lea.vmem [#allocation2], %s309
        %p311 = pneg %p62
        %p312 = pneg %p59
        %s313 = sand.u32 %s27, 1
        %s314 = scalar_lea.sflag [#allocation6], %s313
        %s315 = sand.u32 %s75, 1
        %s316 = smul.addr %s315, 8
        %s317 = scalar_lea.vmem [#allocation5], %s316
        %p318 = pneg %p88
        %p319 = pneg %p85
        %s320 = sand.u32 %s27, 1
        %s321 = scalar_lea.sflag [#allocation6], %s320
        %s322 = sand.u32 %s101, 1
        %s323 = smul.addr %s322, 8
        %s324 = scalar_lea.vmem [#allocation7], %s323
        %p325 = pneg %p114
        %p326 = pneg %p111
        %s327 = sand.u32 %s129, 1
        %s328 = scalar_lea.sflag [#allocation9], %s327
        %s329 = sand.u32 %s129, 1
        %s330 = smul.addr %s329, 8
        %s331 = scalar_lea.vmem [#allocation8], %s330
        %p332 = pneg %p142
        %p333 = pneg %p139
        %p334 = pneg %p170
        %p335 = pneg %p167
        %s336 = sand.u32 %s157, 1
        %s337 = scalar_lea.sflag [#allocation4], %s336
        %s338 = sand.u32 %s157, 1
        %s339 = smul.addr %s338, 8
        %s340 = scalar_lea.vmem [#allocation10], %s339
        %v341 = vld [vmem:[%s274] sm:$0xff]
        %v342 = vld [vmem:[%s283] sm:$0xff]
        %v343 = vld [vmem:[%s292] sm:$0xff]
        %v344 = vld [vmem:[%s301] sm:$0xff]
        %345 = vmatprep.subr.mxu0 0.0
        %346 = vmatpush1.xpose.msra.mxu0 %v342
        %347 = vmatprep.subr.mxu0 0.0
        %348 = vmatpush1.xpose.msra.mxu0 0.0
        %349 = vmatprep.subr.mxu0 0.0
        %350 = vmatpush1.xpose.msra.mxu0 0.0
        %351 = vmatprep.subr.mxu0 0.0
        %352 = vmatpush1.xpose.msra.mxu0 0.0
        %353 = vmatprep.subr.mxu0 0.0
        %354 = vmatpush1.xpose.msra.mxu0 0.0
        %355 = vmatprep.subr.mxu0 0.0
        %356 = vmatpush1.xpose.msra.mxu0 0.0
        %357 = vmatprep.subr.mxu0 0.0
        %358 = vmatpush1.xpose.msra.mxu0 0.0
        %359 = vmatprep.subr.mxu0 0.0
        %360 = vmatpush1.xpose.msra.mxu0 0.0
        %361 = vmatprep.subr.mxu0 0.0
        %362 = vmatpush1.xpose.msra.mxu0 0.0
        %363 = vmatprep.subr.mxu0 0.0
        %364 = vmatpush1.xpose.msra.mxu0 0.0
        %365 = vmatprep.subr.mxu0 0.0
        %366 = vmatpush1.xpose.msra.mxu0 0.0
        %367 = vmatprep.subr.mxu0 0.0
        %368 = vmatpush1.xpose.msra.mxu0 0.0
        %369 = vmatprep.subr.mxu0 0.0
        %370 = vmatpush1.xpose.msra.mxu0 0.0
        %371 = vmatprep.subr.mxu0 0.0
        %372 = vmatpush1.xpose.msra.mxu0 0.0
        %373 = vmatprep.subr.mxu0 0.0
        %374 = vmatpush1.xpose.msra.mxu0 0.0
        %375 = vmatprep.subr.mxu0 0.0
        %376 = vmatpush1.xpose.msra.mxu0 0.0
        %377 = vmatprep.subr.mxu0 0.0
        %378 = vmatpush1.xpose.msra.mxu0 0.0
        %379 = vmatprep.subr.mxu0 0.0
        %380 = vmatpush1.xpose.msra.mxu0 0.0
        %381 = vmatprep.subr.mxu0 0.0
        %382 = vmatpush1.xpose.msra.mxu0 0.0
        %383 = vmatprep.subr.mxu0 0.0
        %384 = vmatpush1.xpose.msra.mxu0 0.0
        %385 = vmatprep.subr.mxu0 0.0
        %386 = vmatpush1.xpose.msra.mxu0 0.0
        %387 = vmatprep.subr.mxu0 0.0
        %388 = vmatpush1.xpose.msra.mxu0 0.0
        %389 = vmatprep.subr.mxu0 0.0
        %390 = vmatpush1.xpose.msra.mxu0 0.0
        %391 = vmatprep.subr.mxu0 0.0
        %392 = vmatpush1.xpose.msra.mxu0 0.0
        %393 = vmatprep.subr.mxu0 0.0
        %394 = vmatpush1.xpose.msra.mxu0 0.0
        %395 = vmatprep.subr.mxu0 0.0
        %396 = vmatpush1.xpose.msra.mxu0 0.0
        %397 = vmatprep.subr.mxu0 0.0
        %398 = vmatpush1.xpose.msra.mxu0 0.0
        %399 = vmatprep.subr.mxu0 0.0
        %400 = vmatpush1.xpose.msra.mxu0 0.0
        %401 = vmatprep.subr.mxu0 0.0
        %402 = vmatpush1.xpose.msra.mxu0 0.0
        %403 = vmatprep.subr.mxu0 0.0
        %404 = vmatpush1.xpose.msra.mxu0 0.0
        %405 = vmatprep.subr.mxu0 0.0
        %406 = vmatpush1.xpose.msra.mxu0 0.0
        %407 = vmatprep.subr.mxu0 0.0
        %408 = vmatpush1.xpose.msra.mxu0 0.0
        %409 = vmatprep.mubr.f32.mxu0 0.0
        %410 = vmatmul.mubr.f32.gmra.mrb[0].mxu0 %v341
        %v411 = vpop.f32.mrb[0].mxu0
        %v412 = vadd.f32 0.0, %v411
        %v413 = vpop.f32.mrb[0].mxu0
        %414 = vdwg.mxu0
        %v415 = vmul.f32 %v412, -0.17677669
        %vm416 = vcmask 64512
        %v417 = vsel %vm416, %v415, -inf
        %418 = vmax.xlane.f32.xlu0 %v417
        %v419 = vpop.xlane.xlu0 %418
        %v420 = vsub.f32 %v415, %v419
        %v421 = vmul.f32 %v420, 1.442695
        %v422 = vpow.pop %v421
        %v423 = vsel %vm416, %v422, 0.0
        %424 = vadd.xlane.f32.xlu0 %v423
        %v425 = vpop.xlane.xlu0 %424
        %v426 = vrcp.pop %v425
        %v427 = vsub.f32 0.0, %v426
        %v428 = vmul.f32 %v344, %v427
        %v429 = vmul.f32 %v422, %v428
        %v430 = vmul.f32 %v429, 1.442695
        %v431 = vpow.pop %v430
        %v432 = vsel %vm416, %v431, 0.0
        %433 = vadd.xlane.f32.xlu0 %v432
        %v434 = vpop.xlane.xlu0 %433
        %v435 = vrcp.pop %v434
        %v436 = vmul.f32 %v431, %v435
        %v438 = vsel %vm416, %v436, 0
        %440 = vmatprep.subr.mxu0 0.0
        %441 = vmatpush1.msra.mxu0 %v343
        %442 = vmatprep.subr.mxu0 0.0
        %443 = vmatpush1.msra.mxu0 0.0
        %444 = vmatprep.subr.mxu0 0.0
        %445 = vmatpush1.msra.mxu0 0.0
        %446 = vmatprep.subr.mxu0 0.0
        %447 = vmatpush1.msra.mxu0 0.0
        %448 = vmatprep.subr.mxu0 0.0
        %449 = vmatpush1.msra.mxu0 0.0
        %450 = vmatprep.subr.mxu0 0.0
        %451 = vmatpush1.msra.mxu0 0.0
        %452 = vmatprep.subr.mxu0 0.0
        %453 = vmatpush1.msra.mxu0 0.0
        %454 = vmatprep.subr.mxu0 0.0
        %455 = vmatpush1.msra.mxu0 0.0
        %456 = vmatprep.subr.mxu0 0.0
        %457 = vmatpush1.msra.mxu0 0.0
        %458 = vmatprep.subr.mxu0 0.0
        %459 = vmatpush1.msra.mxu0 0.0
        %460 = vmatprep.subr.mxu0 0.0
        %461 = vmatpush1.msra.mxu0 0.0
        %462 = vmatprep.subr.mxu0 0.0
        %463 = vmatpush1.msra.mxu0 0.0
        %464 = vmatprep.subr.mxu0 0.0
        %465 = vmatpush1.msra.mxu0 0.0
        %466 = vmatprep.subr.mxu0 0.0
        %467 = vmatpush1.msra.mxu0 0.0
        %468 = vmatprep.subr.mxu0 0.0
        %469 = vmatpush1.msra.mxu0 0.0
        %470 = vmatprep.subr.mxu0 0.0
        %471 = vmatpush1.msra.mxu0 0.0
        %472 = vmatprep.subr.mxu0 0.0
        %473 = vmatpush1.msra.mxu0 0.0
        %474 = vmatprep.subr.mxu0 0.0
        %475 = vmatpush1.msra.mxu0 0.0
        %476 = vmatprep.subr.mxu0 0.0
        %477 = vmatpush1.msra.mxu0 0.0
        %478 = vmatprep.subr.mxu0 0.0
        %479 = vmatpush1.msra.mxu0 0.0
        %480 = vmatprep.subr.mxu0 0.0
        %481 = vmatpush1.msra.mxu0 0.0
        %482 = vmatprep.subr.mxu0 0.0
        %483 = vmatpush1.msra.mxu0 0.0
        %484 = vmatprep.subr.mxu0 0.0
        %485 = vmatpush1.msra.mxu0 0.0
        %486 = vmatprep.subr.mxu0 0.0
        %487 = vmatpush1.msra.mxu0 0.0
        %488 = vmatprep.subr.mxu0 0.0
        %489 = vmatpush1.msra.mxu0 0.0
        %490 = vmatprep.subr.mxu0 0.0
        %491 = vmatpush1.msra.mxu0 0.0
        %492 = vmatprep.subr.mxu0 0.0
        %493 = vmatpush1.msra.mxu0 0.0
        %494 = vmatprep.subr.mxu0 0.0
        %495 = vmatpush1.msra.mxu0 0.0
        %496 = vmatprep.subr.mxu0 0.0
        %497 = vmatpush1.msra.mxu0 0.0
        %498 = vmatprep.subr.mxu0 0.0
        %499 = vmatpush1.msra.mxu0 0.0
        %500 = vmatprep.subr.mxu0 0.0
        %501 = vmatpush1.msra.mxu0 0.0
        %502 = vmatprep.subr.mxu0 0.0
        %503 = vmatpush1.msra.mxu0 0.0
        %504 = vmatprep.mubr.f32.mxu0 0.0
        %505 = vmatmul.mubr.f32.gmra.mrb[0].mxu0 %v438
        %v506 = vpop.f32.mrb[0].mxu0
        %v507 = vadd.f32 0.0, %v506
        %v508 = vpop.f32.mrb[0].mxu0
        %509 = vdwg.mxu0
        %510 = vst [vmem:[%s340] sm:$0xff] %v507
        %s511 = sand.u32 %s157, 1
        %s512 = scalar_lea.sflag [#allocation4], %s511
        %s513 = sand.u32 %s157, 1
        %s514 = smul.addr %s513, 8
        %s515 = scalar_lea.vmem [#allocation10], %s514
        // Predicated region
        $region53: #{tpu_custom_call.1} parent=35 // pred_check
          %p516 = pneg %p167
        $region54: #{tpu_custom_call.1} parent=35 // pred_check_branch
          %518 = sbr.rel (%p516) target = $region56
        $region55: #{tpu_custom_call.1} parent=35 // pred_region
          %s520 = ssub.s32 128, 128
          %521 = vsyncadd %s512, %s520
          %s522 = sadd.s32 %s32, %s31
          %s523 = smul.addr %s522, 128
          %s524 = scalar_lea.hbm %s4, %s523
          %s526 = sshll.u32 %s515, 4
          %s527 = int_to_ptr.vmem [resolvable:$true] %s526
          %529 = dma.vmem_to_hbm [thread:$0]  %s527, 128, %s524, %s512
        $region56: #{tpu_custom_call.1} parent=35 // pred_fallthru
          _
      $region36: #{tpu_custom_call.1} parent=5 // pred_fallthru
        _
      %p530 = scmp.le.s32.totalorder 2, %s22
      // Predicated region
      $region57: #{tpu_custom_call.1} parent=5 // pred_check
        %p531 = pneg %p530
      $region58: #{tpu_custom_call.1} parent=5 // pred_check_branch
        %533 = sbr.rel (%p531) target = $region60
      $region59: #{tpu_custom_call.1} parent=5 // pred_region
        %s534 = ssub.s32 %s22, 2
        // Predicated region
        $region61: #{tpu_custom_call.1} parent=59 // pred_check
          %p535 = pneg %p173
        $region62: #{tpu_custom_call.1} parent=59 // pred_check_branch
          %537 = sbr.rel (%p535) target = $region64
        $region63: #{tpu_custom_call.1} parent=59 // pred_region
          %s538 = sand.u32 %s158, 1
          %s539 = scalar_lea.sflag [#allocation4], %s538
          %s540 = sand.u32 %s158, 1
          %s541 = smul.addr %s540, 8
          %s542 = scalar_lea.vmem [#allocation10], %s541
          %543 = dma.done %s539, 128
        $region64: #{tpu_custom_call.1} parent=59 // pred_fallthru
          _
      $region60: #{tpu_custom_call.1} parent=5 // pred_fallthru
        _
    $region6: #{tpu_custom_call.1} parent=1 // loop_footer
      %s26 = sadd.s32 1, %s22
    $region7: #{tpu_custom_call.1} parent=1 // loop_footer_branch
      %21 = sbr.rel target = $region3
    $region8: #{tpu_custom_call.1} parent=1 // loop_exit
      _
    %544 = vsyncpa [#allocation3], 1
    %s545 = scalar_lea.sflag [#allocation3], 1
    %546 = vsyncpa %s545, 1
    %547 = vsyncpa [#allocation6], 1
    %s548 = scalar_lea.sflag [#allocation6], 1
    %549 = vsyncpa %s548, 1
    %550 = vsyncpa [#allocation9], 1
    %s551 = scalar_lea.sflag [#allocation9], 1
    %552 = vsyncpa %s551, 1
    %553 = vsyncpa [#allocation4], 1
    %s554 = scalar_lea.sflag [#allocation4], 1
    %555 = vsyncpa %s554, 1

</llo_original>
